<compile_context>
chip_gen: v5e
topology: v5e:2x2
jax: 0.10.0
libtpu: 0.0.40
codegen_flags: <defaults>
</compile_context>

<pallas_src>
import functools

import jax
import jax.numpy as jnp
from jax.experimental import pallas as pl
from jax.experimental.pallas import tpu as pltpu


def _round_up(n, m):
    return ((n + m - 1) // m) * m


def _cdiv(a, b):
    return (a + b - 1) // b


def mlp_kernel(x_ref, w1_ref, b1_ref, w2_ref, b2_ref, o_ref):
    # x_ref : (tm, In)      VMEM  batch tile (In == full feature dim, unpadded)
    # w1_ref: (In, H_p)     VMEM  resident across the batch grid
    # b1_ref: (1, H_p)      VMEM  f32
    # w2_ref: (H_p, Out)    VMEM  resident (Out == full output dim, unpadded)
    # b2_ref: (1, Out)      VMEM  f32
    # o_ref : (tm, Out)     VMEM  f32
    x = x_ref[...].astype(jnp.float32)
    w1 = w1_ref[...].astype(jnp.float32)   # no-op for f32 params; upcast for bf16
    w2 = w2_ref[...].astype(jnp.float32)

    # Hidden layer on the MXU with f32 accumulation; bias + ReLU in f32 (VPU).
    h = jnp.dot(x, w1, preferred_element_type=jnp.float32)
    h = jnp.maximum(h + b1_ref[...], 0.0)

    # Output layer (weight-only quant semantics when params are bf16).
    out = jnp.dot(h, w2, preferred_element_type=jnp.float32)
    o_ref[...] = (out + b2_ref[...]).astype(o_ref.dtype)


def prepare_params(w1, b1, w2, b2, *, param_dtype=None):
    """Pad / cast the parameters ONCE, outside the per-call forward path.

    Only the hidden dim is padded (to a lane-dense multiple of 128) so the
    intermediate activation and both MXU contractions use full vreg lanes.
    The padding is zeros, so the math is bit-exact for the f32 path.
    """
    In, H = w1.shape
    H2, Out = w2.shape
    assert H == H2, "shape mismatch between hidden and output layers"
    H_p = _round_up(H, 128)
    wd = w1.dtype if param_dtype is None else param_dtype

    w1p = jnp.pad(w1.astype(wd), ((0, 0), (0, H_p - H)))
    b1p = jnp.pad(b1.reshape(1, -1).astype(jnp.float32), ((0, 0), (0, H_p - H)))
    w2p = jnp.pad(w2.astype(wd), ((0, H_p - H), (0, 0)))
    b2p = b2.reshape(1, -1).astype(jnp.float32)
    return w1p, b1p, w2p, b2p


@functools.partial(jax.jit, static_argnames=("batch_tile",))
def neural_network_forward(x, w1p, b1p, w2p, b2p, *, batch_tile=512):
    """Fused Linear -> ReLU -> Linear as a single Pallas TPU kernel."""
    B, In = x.shape
    In_w, H_p = w1p.shape
    H_p2, Out = w2p.shape
    assert In == In_w and H_p == H_p2, "shape mismatch"

    # ---- batch tile selection (static, shape-driven) -----------------------
    # * sublane-aligned (multiple of 8), or the full batch dim when B <= 8
    # * large tiles (default target 512 rows) to amortize per-step overhead
    # * >= 2 grid steps whenever B allows so the "parallel" axis can shard
    #   across v7x's two TensorCores (no-op on single-TC v5e/v6e)
    align = 8
    if B <= align:
        tm = B                       # block == full array dim -> always legal
    else:
        tm = max(align, min(batch_tile, _round_up(_cdiv(B, 2), align)))
    grid = (_cdiv(B, tm),)           # ragged last block is masked by Pallas

    return pl.pallas_call(
        mlp_kernel,
        out_shape=jax.ShapeDtypeStruct((B, Out), jnp.float32),
        grid_spec=pltpu.PrefetchScalarGridSpec(
            num_scalar_prefetch=0,
            grid=grid,
            in_specs=[
                pl.BlockSpec((tm, In), lambda i: (i, 0)),    # x batch tile
                pl.BlockSpec((In, H_p), lambda i: (0, 0)),   # W1 (resident)
                pl.BlockSpec((1, H_p), lambda i: (0, 0)),    # b1
                pl.BlockSpec((H_p, Out), lambda i: (0, 0)),  # W2 (resident)
                pl.BlockSpec((1, Out), lambda i: (0, 0)),    # b2
            ],
            out_specs=pl.BlockSpec((tm, Out), lambda i: (i, 0)),
        ),
        compiler_params=pltpu.CompilerParams(
            dimension_semantics=("parallel",),   # batch tiles are independent
        ),
    )(x, w1p, b1p, w2p, b2p)


def init_params(key, input_size, hidden_size, output_size, dtype=jnp.float32):
    """Deterministic init mimicking PyTorch nn.Linear defaults
    (uniform in [-1/sqrt(fan_in), 1/sqrt(fan_in)]); weights stored
    (in_features, out_features) so the kernel does plain x @ W."""
    k1, k2, k3, k4 = jax.random.split(key, 4)
    bound1 = 1.0 / jnp.sqrt(jnp.asarray(input_size, dtype))
    bound2 = 1.0 / jnp.sqrt(jnp.asarray(hidden_size, dtype))
    w1 = jax.random.uniform(k1, (input_size, hidden_size), dtype,
                            minval=-bound1, maxval=bound1)
    b1 = jax.random.uniform(k2, (1, hidden_size), dtype,
                            minval=-bound1, maxval=bound1)
    w2 = jax.random.uniform(k3, (hidden_size, output_size), dtype,
                            minval=-bound2, maxval=bound2)
    b2 = jax.random.uniform(k4, (1, output_size), dtype,
                            minval=-bound2, maxval=bound2)
    return w1, b1, w2, b2


if __name__ == "__main__":
    # Small shapes consistent with the module's forward:
    # x: (batch, input_size), hidden_size=32, output_size=4
    input_size, hidden_size, output_size = 16, 32, 4

    key = jax.random.PRNGKey(0)
    kx, kx2, kp = jax.random.split(key, 3)
    w1, b1, w2, b2 = init_params(kp, input_size, hidden_size, output_size)

    # Parameters are padded / cast once, outside the per-call path.
    params_f32 = prepare_params(w1, b1, w2, b2)

    # --- small batch (single grid step, block == full batch dim) -----------
    x = jax.random.normal(kx, (8, input_size), jnp.float32)
    ref = jnp.maximum(x @ w1 + b1, 0.0) @ w2 + b2
    out = jax.block_until_ready(neural_network_forward(x, *params_f32))
    assert out.shape == (8, output_size)
    assert jnp.allclose(out, ref, atol=1e-4, rtol=1e-4)

    # --- larger batch (multi-step parallel grid + ragged masked last block) -
    xb = jax.random.normal(kx2, (200, input_size), jnp.float32)
    refb = jnp.maximum(xb @ w1 + b1, 0.0) @ w2 + b2
    outb = jax.block_until_ready(neural_network_forward(xb, *params_f32))
    assert outb.shape == (200, output_size)
    assert jnp.allclose(outb, refb, atol=1e-4, rtol=1e-4)

    # --- bf16 weight-only quantization path (weights upcast in-kernel) -----
    params_bf16 = prepare_params(w1, b1, w2, b2, param_dtype=jnp.bfloat16)
    outq = jax.block_until_ready(neural_network_forward(xb, *params_bf16))
    assert outq.shape == (200, output_size)
    assert jnp.allclose(outq, refb, atol=5e-2, rtol=5e-2)

    print("KERNEL_OK")
</pallas_src>

<mosaic_0001>
module attributes {stable_mosaic.version = 11 : i64} {
  func.func @mlp_kernel(%arg0: i32, %arg1: memref<8x16xf32, #tpu.memory_space<vmem>>, %arg2: memref<16x128xf32, #tpu.memory_space<vmem>>, %arg3: memref<1x128xf32, #tpu.memory_space<vmem>>, %arg4: memref<128x4xf32, #tpu.memory_space<vmem>>, %arg5: memref<1x4xf32, #tpu.memory_space<vmem>>, %arg6: memref<8x4xf32, #tpu.memory_space<vmem>>) attributes {dimension_semantics = [#tpu.dimension_semantics<parallel>], iteration_bounds = array<i64: 1>, scalar_prefetch = 0 : i64, scratch_operands = 0 : i64, tpu.core_type = #tpu.core_type<tc>, window_params = [{transform_indices = @transform_0, window_bounds = array<i64: 8, 16>}, {pipeline_mode = #tpu.pipeline_mode<synchronous>, transform_indices = @transform_1, window_bounds = array<i64: 16, 128>}, {pipeline_mode = #tpu.pipeline_mode<synchronous>, transform_indices = @transform_2, window_bounds = array<i64: 1, 128>}, {pipeline_mode = #tpu.pipeline_mode<synchronous>, transform_indices = @transform_3, window_bounds = array<i64: 128, 4>}, {pipeline_mode = #tpu.pipeline_mode<synchronous>, transform_indices = @transform_4, window_bounds = array<i64: 1, 4>}, {transform_indices = @transform_5, window_bounds = array<i64: 8, 4>}]} {
    %c0 = arith.constant 0 : index
    %c0_0 = arith.constant 0 : index
    %0 = vector.load %arg1[%c0, %c0_0] : memref<8x16xf32, #tpu.memory_space<vmem>>, vector<8x16xf32>
    %c0_1 = arith.constant 0 : index
    %c0_2 = arith.constant 0 : index
    %1 = vector.load %arg2[%c0_1, %c0_2] : memref<16x128xf32, #tpu.memory_space<vmem>>, vector<16x128xf32>
    %c0_3 = arith.constant 0 : index
    %c0_4 = arith.constant 0 : index
    %2 = vector.load %arg4[%c0_3, %c0_4] : memref<128x4xf32, #tpu.memory_space<vmem>>, vector<128x4xf32>
    %cst = arith.constant dense<0.000000e+00> : vector<8x128xf32>
    %3 = tpu.matmul %0, %1, %cst {dimension_numbers = #tpu.dot_dimension_numbers<[1], [0], [0], [1], [0, 0, 1, 1], [], []>} : vector<8x16xf32>, vector<16x128xf32>, vector<8x128xf32> -> vector<8x128xf32>
    %c0_5 = arith.constant 0 : index
    %c0_6 = arith.constant 0 : index
    %4 = vector.load %arg3[%c0_5, %c0_6] : memref<1x128xf32, #tpu.memory_space<vmem>>, vector<1x128xf32>
    %5 = vector.broadcast %4 : vector<1x128xf32> to vector<8x128xf32>
    %6 = arith.addf %3, %5 : vector<8x128xf32>
    %cst_7 = arith.constant 0.000000e+00 : f32
    %7 = vector.broadcast %cst_7 : f32 to vector<8x128xf32>
    %8 = arith.maximumf %6, %7 : vector<8x128xf32>
    %cst_8 = arith.constant dense<0.000000e+00> : vector<8x4xf32>
    %9 = tpu.matmul %8, %2, %cst_8 {dimension_numbers = #tpu.dot_dimension_numbers<[1], [0], [0], [1], [0, 0, 1, 1], [], []>} : vector<8x128xf32>, vector<128x4xf32>, vector<8x4xf32> -> vector<8x4xf32>
    %c0_9 = arith.constant 0 : index
    %c0_10 = arith.constant 0 : index
    %10 = vector.load %arg5[%c0_9, %c0_10] : memref<1x4xf32, #tpu.memory_space<vmem>>, vector<1x4xf32>
    %11 = vector.broadcast %10 : vector<1x4xf32> to vector<8x4xf32>
    %12 = arith.addf %9, %11 : vector<8x4xf32>
    %c0_11 = arith.constant 0 : index
    %c0_12 = arith.constant 0 : index
    %13 = vector.load %arg6[%c0_11, %c0_12] : memref<8x4xf32, #tpu.memory_space<vmem>>, vector<8x4xf32>
    tpu.vector_store %arg6[%c0_11, %c0_12], %12 {strides = array<i32>} : memref<8x4xf32, #tpu.memory_space<vmem>>, vector<8x4xf32>,
    return
  }
  func.func @transform_0(%arg0: i32) -> (i32, i32) {
    %c0_i32 = arith.constant 0 : i32
    %c0_i32_0 = arith.constant 0 : i32
    return %arg0, %c0_i32 : i32, i32
  }
  func.func @transform_1(%arg0: i32) -> (i32, i32) {
    %c0_i32 = arith.constant 0 : i32
    %c0_i32_0 = arith.constant 0 : i32
    %c0_i32_1 = arith.constant 0 : i32
    return %c0_i32, %c0_i32_0 : i32, i32
  }
  func.func @transform_2(%arg0: i32) -> (i32, i32) {
    %c0_i32 = arith.constant 0 : i32
    %c0_i32_0 = arith.constant 0 : i32
    %c0_i32_1 = arith.constant 0 : i32
    return %c0_i32, %c0_i32_0 : i32, i32
  }
  func.func @transform_3(%arg0: i32) -> (i32, i32) {
    %c0_i32 = arith.constant 0 : i32
    %c0_i32_0 = arith.constant 0 : i32
    %c0_i32_1 = arith.constant 0 : i32
    return %c0_i32, %c0_i32_0 : i32, i32
  }
  func.func @transform_4(%arg0: i32) -> (i32, i32) {
    %c0_i32 = arith.constant 0 : i32
    %c0_i32_0 = arith.constant 0 : i32
    %c0_i32_1 = arith.constant 0 : i32
    return %c0_i32, %c0_i32_0 : i32, i32
  }
  func.func @transform_5(%arg0: i32) -> (i32, i32) {
    %c0_i32 = arith.constant 0 : i32
    %c0_i32_0 = arith.constant 0 : i32
    return %arg0, %c0_i32 : i32, i32
  }
}

</mosaic_0001>

<llo_original>
// kernel: neural_network_forward.1
$region0: #{neural_network_forward.1}
  #allocation0 [shape = 'u32[]', space=smem, size = 0x4, offset = 0x4, fixed_abs, tag = 'smem constant byte address 0x4 - core index']
  #allocation1 [shape = 'u32[72,128]{1,0:T(1,128)}', space=vmem, size = 0x9000, scoped, tag = 'internal scratch']
  %s0 = inlined_call_operand.vmem [shape: f32[8,16], index: 0, kind: input, shape index: {}]
  %s1 = inlined_call_operand.vmem [shape: f32[16,128], index: 1, kind: input, shape index: {}]
  %s2 = inlined_call_operand.vmem [shape: f32[1,128], index: 2, kind: input, shape index: {}]
  %s3 = inlined_call_operand.vmem [shape: f32[128,4], index: 3, kind: input, shape index: {}]
  %s4 = inlined_call_operand.vmem [shape: f32[1,4], index: 4, kind: input, shape index: {}]
  %s5 = inlined_call_operand.vmem [shape: f32[8,4], index: 5, kind: output, shape index: {}]
  %s6 = sld [smem:[#allocation0]]
  $region30: #{neural_network_forward.1} parent=0
    _
  %s8 = ssub.s32 1, %s6
  %s9 = scalar_select 0, %s8, %s6
  // Predicated region
  $region2: #{neural_network_forward.1} parent=0 // pred_check
    _
  $region3: #{neural_network_forward.1} parent=0 // pred_check_branch
    %11 = sbr.rel (0) target = $region5
  $region4: #{neural_network_forward.1} parent=0 // pred_region
    _
  $region5: #{neural_network_forward.1} parent=0 // pred_fallthru
    _
  // Predicated region
  $region6: #{neural_network_forward.1} parent=0 // pred_check
    _
  $region7: #{neural_network_forward.1} parent=0 // pred_check_branch
    %13 = sbr.rel (0) target = $region9
  $region8: #{neural_network_forward.1} parent=0 // pred_region
    _
  $region9: #{neural_network_forward.1} parent=0 // pred_fallthru
    _
  // Predicated region
  $region10: #{neural_network_forward.1} parent=0 // pred_check
    _
  $region11: #{neural_network_forward.1} parent=0 // pred_check_branch
    %15 = sbr.rel (0) target = $region13
  $region12: #{neural_network_forward.1} parent=0 // pred_region
    _
  $region13: #{neural_network_forward.1} parent=0 // pred_fallthru
    _
  // Predicated region
  $region14: #{neural_network_forward.1} parent=0 // pred_check
    _
  $region15: #{neural_network_forward.1} parent=0 // pred_check_branch
    %17 = sbr.rel (0) target = $region17
  $region16: #{neural_network_forward.1} parent=0 // pred_region
    _
  $region17: #{neural_network_forward.1} parent=0 // pred_fallthru
    _
  // Predicated region
  $region18: #{neural_network_forward.1} parent=0 // pred_check
    _
  $region19: #{neural_network_forward.1} parent=0 // pred_check_branch
    %19 = sbr.rel (0) target = $region21
  $region20: #{neural_network_forward.1} parent=0 // pred_region
    _
  $region21: #{neural_network_forward.1} parent=0 // pred_fallthru
    _
  %v20 = vld [vmem:[%s0] sm:$0xff]
  %v21 = vld [vmem:[%s1] sm:$0xff]
  %v22 = vld [vmem:[%s1 + $0x8] sm:$0xff]
  %v23 = vld [vmem:[%s3] sm:$0xff]
  %v24 = vld [vmem:[%s3 + $0x8] sm:$0xff]
  %v25 = vld [vmem:[%s3 + $0x10] sm:$0xff]
  %v26 = vld [vmem:[%s3 + $0x18] sm:$0xff]
  %v27 = vld [vmem:[%s3 + $0x20] sm:$0xff]
  %v28 = vld [vmem:[%s3 + $0x28] sm:$0xff]
  %v29 = vld [vmem:[%s3 + $0x30] sm:$0xff]
  %v30 = vld [vmem:[%s3 + $0x38] sm:$0xff]
  %v31 = vld [vmem:[%s3 + $0x40] sm:$0xff]
  %v32 = vld [vmem:[%s3 + $0x48] sm:$0xff]
  %v33 = vld [vmem:[%s3 + $0x50] sm:$0xff]
  %v34 = vld [vmem:[%s3 + $0x58] sm:$0xff]
  %v35 = vld [vmem:[%s3 + $0x60] sm:$0xff]
  %v36 = vld [vmem:[%s3 + $0x68] sm:$0xff]
  %v37 = vld [vmem:[%s3 + $0x70] sm:$0xff]
  %v38 = vld [vmem:[%s3 + $0x78] sm:$0xff]
  %v39 = vld [vmem:[%s2] sm:$0x1]
  %v41 = vperm.slane %v39, 0
  %vm43 = vcmask 130048
  %v45 = vsel %vm43, %v20, 0
  %47 = vmatpush.msra.mxu0 0.0
  %48 = vmatpush.msra.mxu0 0.0
  %49 = vmatpush.msra.mxu0 0.0
  %50 = vmatpush.msra.mxu0 0.0
  %51 = vmatpush.msra.mxu0 0.0
  %52 = vmatpush.msra.mxu0 0.0
  %53 = vmatpush.msra.mxu0 0.0
  %54 = vmatpush.msra.mxu0 0.0
  %55 = vmatpush.msra.mxu0 0.0
  %56 = vmatpush.msra.mxu0 0.0
  %57 = vmatpush.msra.mxu0 0.0
  %58 = vmatpush.msra.mxu0 0.0
  %59 = vmatpush.msra.mxu0 0.0
  %60 = vmatpush.msra.mxu0 0.0
  %61 = vmatpush.msra.mxu0 %v22
  %62 = vmatpush.msra.mxu0 %v21
  %63 = vmatmul.f32.gmra.mxu0 %v45
  %v64 = vpop.f32.mrf.mxu0
  %v65 = vadd.f32 %v41, %v64
  %66 = vdwg.mxu0
  %v67 = vmax.f32 %v65, 0.0
  %v68 = vld [vmem:[%s4] sm:$0x1]
  %v70 = vperm.slane %v68, 0
  %72 = vmatpush.msra.mxu0 %v38
  %73 = vmatpush.msra.mxu0 %v37
  %74 = vmatpush.msra.mxu0 %v36
  %75 = vmatpush.msra.mxu0 %v35
  %76 = vmatpush.msra.mxu0 %v34
  %77 = vmatpush.msra.mxu0 %v33
  %78 = vmatpush.msra.mxu0 %v32
  %79 = vmatpush.msra.mxu0 %v31
  %80 = vmatpush.msra.mxu0 %v30
  %81 = vmatpush.msra.mxu0 %v29
  %82 = vmatpush.msra.mxu0 %v28
  %83 = vmatpush.msra.mxu0 %v27
  %84 = vmatpush.msra.mxu0 %v26
  %85 = vmatpush.msra.mxu0 %v25
  %86 = vmatpush.msra.mxu0 %v24
  %87 = vmatpush.msra.mxu0 %v23
  %88 = vmatmul.f32.gmra.mxu0 %v67
  %v89 = vpop.f32.mrf.mxu0
  %v90 = vadd.f32 %v70, %v89
  %91 = vdwg.mxu0
  %vm92 = vcmask 31744
  %93 = vst.msk [vmem:[%s5] sm:$0xff] %vm92, %v90
  // Predicated region
  $region22: #{neural_network_forward.1} parent=0 // pred_check
    _
  $region23: #{neural_network_forward.1} parent=0 // pred_check_branch
    %95 = sbr.rel (0) target = $region25
  $region24: #{neural_network_forward.1} parent=0 // pred_region
    _
  $region25: #{neural_network_forward.1} parent=0 // pred_fallthru
    _
  // Predicated region
  $region26: #{neural_network_forward.1} parent=0 // pred_check
    _
  $region27: #{neural_network_forward.1} parent=0 // pred_check_branch
    %97 = sbr.rel (0) target = $region29
  $region28: #{neural_network_forward.1} parent=0 // pred_region
    _
  $region29: #{neural_network_forward.1} parent=0 // pred_fallthru
    _

</llo_original>
